<compile_context>
chip_gen: v7x
topology: tpu7x:2x2x1
jax: 0.10.0
libtpu: 0.0.40
codegen_flags: <defaults>
</compile_context>

<pallas_src>
import functools

import jax
import jax.numpy as jnp
from jax import lax
from jax.experimental import pallas as pl
from jax.experimental.pallas import tpu as pltpu


def _layernorm(v, gamma, beta, eps=1e-5):
    mu = jnp.mean(v, axis=-1, keepdims=True)
    var = jnp.mean((v - mu) ** 2, axis=-1, keepdims=True)
    return (v - mu) * lax.rsqrt(var + eps) * gamma + beta


def block_kernel(x_ref, ln1_g_ref, ln1_b_ref, wqkv_ref,
                 ln2_g_ref, ln2_b_ref,
                 w1_ref, b1_ref, w2_ref, b2_ref,
                 o_ref, *, n_heads, batch, seq, head_size):
    x = x_ref[...]                                # (B*T, E) float32
    B, T, H, nH = batch, seq, head_size, n_heads

    # ---- LayerNorm 1 (f32) ----
    y = _layernorm(x, ln1_g_ref[...], ln1_b_ref[...])

    # ---- Fused QKV projection: one wide bf16 matmul, f32 accumulation ----
    # wqkv columns: [Q_0..Q_{nH-1} | K_0..K_{nH-1} | V_0..V_{nH-1}], wq pre-scaled by H**-0.5.
    qkv = jnp.dot(y.astype(jnp.bfloat16), wqkv_ref[...],
                  preferred_element_type=jnp.float32)        # (B*T, 3*nH*H)
    qkv = qkv.reshape(B, T, 3 * nH * H)                      # sublane-aligned unfold (T % 8 == 0)

    # Causal mask (row attends to col iff row >= col), broadcast hoisted out of the head loop.
    row = lax.broadcasted_iota(jnp.int32, (T, T), 0)
    col = lax.broadcasted_iota(jnp.int32, (T, T), 1)
    causal = jnp.broadcast_to((row >= col)[None], (B, T, T))
    neg = jnp.float32(-1e30)

    # ---- Multi-head causal self-attention (heads summed, not concatenated) ----
    att = jnp.zeros((B, T, H), jnp.float32)
    for h in range(nH):                                      # static unroll over (few) heads
        q = qkv[..., h * H:(h + 1) * H].astype(jnp.bfloat16)
        k = qkv[..., (nH + h) * H:(nH + h + 1) * H].astype(jnp.bfloat16)
        v = qkv[..., (2 * nH + h) * H:(2 * nH + h + 1) * H].astype(jnp.bfloat16)
        # scores = q @ k^T, batched over B (1/sqrt(H) already folded into wq in the wrapper)
        s = jnp.einsum('bqd,bkd->bqk', q, k,
                       preferred_element_type=jnp.float32)   # (B, T, T) f32
        s = jnp.where(causal, s, neg)
        s = s - jnp.max(s, axis=-1, keepdims=True)
        e = jnp.exp(s)
        p = e * pl.reciprocal(jnp.sum(e, axis=-1, keepdims=True), approx=True)
        att = att + jnp.einsum('bqk,bkd->bqd', p.astype(jnp.bfloat16), v,
                               preferred_element_type=jnp.float32)

    att = att.reshape(B * T, H)                   # H == E required (summed-heads residual)
    y = att + x                                   # residual 1 (dropout = identity)

    # ---- LayerNorm 2 (f32) ----
    y2 = _layernorm(y, ln2_g_ref[...], ln2_b_ref[...])

    # ---- FFN (Linear -> ReLU -> Linear), bf16 matmuls, f32 accumulation ----
    h1 = jnp.dot(y2.astype(jnp.bfloat16), w1_ref[...],
                 preferred_element_type=jnp.float32) + b1_ref[...]
    h1 = jnp.maximum(h1, 0.0)
    f = jnp.dot(h1.astype(jnp.bfloat16), w2_ref[...],
                preferred_element_type=jnp.float32) + b2_ref[...]

    o_ref[...] = f + y2                           # residual 2 (dropout = identity)


def block_forward(x, params, n_heads):
    B, T, E = x.shape
    (ln1_g, ln1_b, wq, wk, wv, ln2_g, ln2_b, w1, b1, w2, b2) = params
    H = wq.shape[-1]
    assert H == E, "summed-heads residual requires head_size == n_embedding"

    # --- wrapper-side weight prep (trace-time): fuse QKV, fold scale, cast to bf16 ---
    scale = H ** -0.5

    def flat(w):  # (nH, E, H) -> (E, nH*H); head h lands at columns [h*H, (h+1)*H)
        return jnp.transpose(w, (1, 0, 2)).reshape(E, n_heads * H)

    w_qkv = jnp.concatenate([flat(wq * scale), flat(wk), flat(wv)],
                            axis=-1).astype(jnp.bfloat16)    # (E, 3*nH*H)
    w1_bf = w1.astype(jnp.bfloat16)
    w2_bf = w2.astype(jnp.bfloat16)

    x2 = x.reshape(B * T, E)                      # fold batch into one block

    kernel = functools.partial(block_kernel, n_heads=n_heads,
                               batch=B, seq=T, head_size=H)

    def full_spec(a):
        nd = a.ndim
        return pl.BlockSpec(a.shape, lambda i, _nd=nd: (0,) * _nd)

    in_arrays = [x2, ln1_g, ln1_b, w_qkv, ln2_g, ln2_b, w1_bf, b1, w2_bf, b2]
    in_specs = [full_spec(a) for a in in_arrays]
    out_spec = pl.BlockSpec((B * T, E), lambda i: (0, 0))

    out2 = pl.pallas_call(
        kernel,
        out_shape=jax.ShapeDtypeStruct((B * T, E), jnp.float32),
        grid_spec=pltpu.PrefetchScalarGridSpec(
            num_scalar_prefetch=0,
            grid=(1,),
            in_specs=in_specs,
            out_specs=out_spec,
        ),
        compiler_params=pltpu.CompilerParams(
            dimension_semantics=("arbitrary",)),
    )(*in_arrays)
    return out2.reshape(B, T, E)


def reference_forward(x, params, n_heads):
    """Pure-JAX f32 reference mirroring the PyTorch Block forward (eval mode)."""
    (ln1_g, ln1_b, wq, wk, wv, ln2_g, ln2_b, w1, b1, w2, b2) = params
    B, T, E = x.shape
    H = wq.shape[-1]

    def ln(v, g, b):
        mu = jnp.mean(v, axis=-1, keepdims=True)
        var = jnp.mean((v - mu) ** 2, axis=-1, keepdims=True)
        return (v - mu) / jnp.sqrt(var + 1e-5) * g[0] + b[0]

    y = ln(x, ln1_g, ln1_b)
    mask = jnp.tril(jnp.ones((T, T), bool))
    att = jnp.zeros((B, T, H), jnp.float32)
    for h in range(n_heads):
        Q = y @ wq[h]
        K = y @ wk[h]
        V = y @ wv[h]
        A = (Q @ jnp.swapaxes(K, -1, -2)) * (H ** -0.5)
        A = jnp.where(mask[None], A, -jnp.inf)
        A = jax.nn.softmax(A, axis=-1)
        att = att + A @ V
    y = att + x
    y2 = ln(y, ln2_g, ln2_b)
    f = jnp.maximum(y2 @ w1 + b1[0], 0.0) @ w2 + b2[0]
    return f + y2


def make_params(key, n_embedding, n_heads, head_size):
    E, H = n_embedding, head_size
    ks = jax.random.split(key, 8)
    scale = 0.02
    ln1_g = jnp.ones((1, E), jnp.float32)
    ln1_b = jnp.zeros((1, E), jnp.float32)
    wq = scale * jax.random.normal(ks[0], (n_heads, E, H), jnp.float32)
    wk = scale * jax.random.normal(ks[1], (n_heads, E, H), jnp.float32)
    wv = scale * jax.random.normal(ks[2], (n_heads, E, H), jnp.float32)
    ln2_g = jnp.ones((1, E), jnp.float32)
    ln2_b = jnp.zeros((1, E), jnp.float32)
    w1 = scale * jax.random.normal(ks[3], (E, 4 * E), jnp.float32)
    b1 = scale * jax.random.normal(ks[4], (1, 4 * E), jnp.float32)
    w2 = scale * jax.random.normal(ks[5], (4 * E, E), jnp.float32)
    b2 = scale * jax.random.normal(ks[6], (1, E), jnp.float32)
    return (ln1_g, ln1_b, wq, wk, wv, ln2_g, ln2_b, w1, b1, w2, b2)


if __name__ == "__main__":
    # Small shapes consistent with the module: n (max seq) = 8, T = 8,
    # n_embedding = 32, n_heads = 2, head_size = n_embedding (required by the
    # sum-of-heads residual in MultiHead/Block).
    B, T, E = 2, 8, 32
    n_heads = 2
    head_size = E

    key = jax.random.PRNGKey(0)
    kx, kp = jax.random.split(key)
    x = jax.random.normal(kx, (B, T, E), jnp.float32)
    params = make_params(kp, E, n_heads, head_size)

    out = jax.block_until_ready(block_forward(x, params, n_heads))
    ref = reference_forward(x, params, n_heads)

    assert out.shape == (B, T, E)
    max_err = jnp.max(jnp.abs(out - ref))
    # bf16 matmul operands + approximate reciprocal -> loosened tolerance vs. the f32 reference.
    assert jnp.allclose(out, ref, rtol=5e-2, atol=5e-2), f"max abs err = {max_err}"

    print("KERNEL_OK")
</pallas_src>

<mosaic_0001>
module attributes {stable_mosaic.version = 11 : i64} {
  func.func @block_kernel(%arg0: i32, %arg1: memref<16x32xf32, #tpu.memory_space<vmem>>, %arg2: memref<1x32xf32, #tpu.memory_space<vmem>>, %arg3: memref<1x32xf32, #tpu.memory_space<vmem>>, %arg4: memref<32x192xbf16, #tpu.memory_space<vmem>>, %arg5: memref<1x32xf32, #tpu.memory_space<vmem>>, %arg6: memref<1x32xf32, #tpu.memory_space<vmem>>, %arg7: memref<32x128xbf16, #tpu.memory_space<vmem>>, %arg8: memref<1x128xf32, #tpu.memory_space<vmem>>, %arg9: memref<128x32xbf16, #tpu.memory_space<vmem>>, %arg10: memref<1x32xf32, #tpu.memory_space<vmem>>, %arg11: memref<16x32xf32, #tpu.memory_space<vmem>>) attributes {dimension_semantics = [#tpu.dimension_semantics<arbitrary>], iteration_bounds = array<i64: 1>, scalar_prefetch = 0 : i64, scratch_operands = 0 : i64, tpu.core_type = #tpu.core_type<tc>, window_params = [{pipeline_mode = #tpu.pipeline_mode<synchronous>, transform_indices = @transform_0, window_bounds = array<i64: 16, 32>}, {pipeline_mode = #tpu.pipeline_mode<synchronous>, transform_indices = @transform_1, window_bounds = array<i64: 1, 32>}, {pipeline_mode = #tpu.pipeline_mode<synchronous>, transform_indices = @transform_2, window_bounds = array<i64: 1, 32>}, {pipeline_mode = #tpu.pipeline_mode<synchronous>, transform_indices = @transform_3, window_bounds = array<i64: 32, 192>}, {pipeline_mode = #tpu.pipeline_mode<synchronous>, transform_indices = @transform_4, window_bounds = array<i64: 1, 32>}, {pipeline_mode = #tpu.pipeline_mode<synchronous>, transform_indices = @transform_5, window_bounds = array<i64: 1, 32>}, {pipeline_mode = #tpu.pipeline_mode<synchronous>, transform_indices = @transform_6, window_bounds = array<i64: 32, 128>}, {pipeline_mode = #tpu.pipeline_mode<synchronous>, transform_indices = @transform_7, window_bounds = array<i64: 1, 128>}, {pipeline_mode = #tpu.pipeline_mode<synchronous>, transform_indices = @transform_8, window_bounds = array<i64: 128, 32>}, {pipeline_mode = #tpu.pipeline_mode<synchronous>, transform_indices = @transform_9, window_bounds = array<i64: 1, 32>}, {pipeline_mode = #tpu.pipeline_mode<synchronous>, transform_indices = @transform_10, window_bounds = array<i64: 16, 32>}]} {
    %c0 = arith.constant 0 : index
    %c0_0 = arith.constant 0 : index
    %0 = vector.load %arg1[%c0, %c0_0] : memref<16x32xf32, #tpu.memory_space<vmem>>, vector<16x32xf32>
    %c0_1 = arith.constant 0 : index
    %c0_2 = arith.constant 0 : index
    %1 = vector.load %arg2[%c0_1, %c0_2] : memref<1x32xf32, #tpu.memory_space<vmem>>, vector<1x32xf32>
    %c0_3 = arith.constant 0 : index
    %c0_4 = arith.constant 0 : index
    %2 = vector.load %arg3[%c0_3, %c0_4] : memref<1x32xf32, #tpu.memory_space<vmem>>, vector<1x32xf32>
    %cst = arith.constant dense<0.000000e+00> : vector<16xf32>
    %3 = vector.multi_reduction <add>, %0, %cst [1] : vector<16x32xf32> to vector<16xf32>
    %4 = vector.shape_cast %3 : vector<16xf32> to vector<16x1xf32>
    %cst_5 = arith.constant 3.200000e+01 : f32
    %5 = vector.broadcast %cst_5 : f32 to vector<16x1xf32>
    %6 = arith.divf %4, %5 : vector<16x1xf32>
    %7 = vector.broadcast %6 : vector<16x1xf32> to vector<16x32xf32>
    %8 = arith.subf %0, %7 : vector<16x32xf32>
    %9 = arith.mulf %8, %8 : vector<16x32xf32>
    %cst_6 = arith.constant dense<0.000000e+00> : vector<16xf32>
    %10 = vector.multi_reduction <add>, %9, %cst_6 [1] : vector<16x32xf32> to vector<16xf32>
    %11 = vector.shape_cast %10 : vector<16xf32> to vector<16x1xf32>
    %cst_7 = arith.constant 3.200000e+01 : f32
    %12 = vector.broadcast %cst_7 : f32 to vector<16x1xf32>
    %13 = arith.divf %11, %12 : vector<16x1xf32>
    %14 = vector.broadcast %6 : vector<16x1xf32> to vector<16x32xf32>
    %15 = arith.subf %0, %14 : vector<16x32xf32>
    %cst_8 = arith.constant 9.99999974E-6 : f32
    %16 = vector.broadcast %cst_8 : f32 to vector<16x1xf32>
    %17 = arith.addf %13, %16 : vector<16x1xf32>
    %18 = math.rsqrt %17 : vector<16x1xf32>
    %19 = vector.broadcast %18 : vector<16x1xf32> to vector<16x32xf32>
    %20 = arith.mulf %15, %19 : vector<16x32xf32>
    %21 = vector.broadcast %1 : vector<1x32xf32> to vector<16x32xf32>
    %22 = arith.mulf %20, %21 : vector<16x32xf32>
    %23 = vector.broadcast %2 : vector<1x32xf32> to vector<16x32xf32>
    %24 = arith.addf %22, %23 : vector<16x32xf32>
    %25 = arith.truncf %24 : vector<16x32xf32> to vector<16x32xbf16>
    %c0_9 = arith.constant 0 : index
    %c0_10 = arith.constant 0 : index
    %26 = vector.load %arg4[%c0_9, %c0_10] : memref<32x192xbf16, #tpu.memory_space<vmem>>, vector<32x192xbf16>
    %cst_11 = arith.constant dense<0.000000e+00> : vector<16x192xf32>
    %27 = tpu.matmul %25, %26, %cst_11 {dimension_numbers = #tpu.dot_dimension_numbers<[1], [0], [0], [1], [0, 0, 1, 1], [], []>} : vector<16x32xbf16>, vector<32x192xbf16>, vector<16x192xf32> -> vector<16x192xf32>
    %28 = vector.shape_cast %27 : vector<16x192xf32> to vector<2x8x192xf32>
    %29 = tpu.iota {dimensions = array<i32: 0>} : vector<8x8xi32>
    %30 = tpu.iota {dimensions = array<i32: 1>} : vector<8x8xi32>
    %31 = arith.cmpi sge, %29, %30 : vector<8x8xi32>
    %32 = vector.shape_cast %31 : vector<8x8xi1> to vector<1x8x8xi1>
    %33 = vector.shape_cast %32 : vector<1x8x8xi1> to vector<1x8x8xi1>
    %34 = vector.broadcast %33 : vector<1x8x8xi1> to vector<2x8x8xi1>
    %cst_12 = arith.constant 0.000000e+00 : f32
    %35 = vector.broadcast %cst_12 : f32 to vector<2x8x32xf32>
    %36 = vector.extract_strided_slice %28 {offsets = [0, 0, 0], sizes = [2, 8, 32], strides = [1, 1, 1]} : vector<2x8x192xf32> to vector<2x8x32xf32>
    %37 = arith.truncf %36 : vector<2x8x32xf32> to vector<2x8x32xbf16>
    %38 = vector.extract_strided_slice %28 {offsets = [0, 0, 64], sizes = [2, 8, 32], strides = [1, 1, 1]} : vector<2x8x192xf32> to vector<2x8x32xf32>
    %39 = arith.truncf %38 : vector<2x8x32xf32> to vector<2x8x32xbf16>
    %40 = vector.extract_strided_slice %28 {offsets = [0, 0, 128], sizes = [2, 8, 32], strides = [1, 1, 1]} : vector<2x8x192xf32> to vector<2x8x32xf32>
    %41 = arith.truncf %40 : vector<2x8x32xf32> to vector<2x8x32xbf16>
    "tpu.trace_start"() <{level = 10 : i32, message = "bqd,bkd->bqk"}> : () -> ()
    %cst_13 = arith.constant dense<0.000000e+00> : vector<2x8x8xf32>
    %42 = tpu.matmul %37, %39, %cst_13 {dimension_numbers = #tpu.dot_dimension_numbers<[2], [2], [1], [1], [0, 0, 0, 1, 1, 1], [0], [0]>} : vector<2x8x32xbf16>, vector<2x8x32xbf16>, vector<2x8x8xf32> -> vector<2x8x8xf32>
    %cst_14 = arith.constant -1.000000e+30 : f32
    "tpu.trace_stop"() : () -> ()
    %43 = vector.broadcast %cst_14 : f32 to vector<2x8x8xf32>
    %44 = arith.select %34, %42, %43 : vector<2x8x8xi1>, vector<2x8x8xf32>
    %cst_15 = arith.constant dense<0xFF800000> : vector<2x8xf32>
    %45 = vector.multi_reduction <maximumf>, %44, %cst_15 [2] : vector<2x8x8xf32> to vector<2x8xf32>
    %46 = vector.shape_cast %45 : vector<2x8xf32> to vector<2x8x1xf32>
    %47 = vector.broadcast %46 : vector<2x8x1xf32> to vector<2x8x8xf32>
    %48 = arith.subf %44, %47 : vector<2x8x8xf32>
    %49 = math.exp %48 : vector<2x8x8xf32>
    %cst_16 = arith.constant dense<0.000000e+00> : vector<2x8xf32>
    %50 = vector.multi_reduction <add>, %49, %cst_16 [2] : vector<2x8x8xf32> to vector<2x8xf32>
    %51 = vector.shape_cast %50 : vector<2x8xf32> to vector<2x8x1xf32>
    %52 = tpu.reciprocal %51 {approx = true} : vector<2x8x1xf32> -> vector<2x8x1xf32>
    %53 = vector.broadcast %52 : vector<2x8x1xf32> to vector<2x8x8xf32>
    %54 = arith.mulf %49, %53 : vector<2x8x8xf32>
    %55 = arith.truncf %54 : vector<2x8x8xf32> to vector<2x8x8xbf16>
    "tpu.trace_start"() <{level = 10 : i32, message = "bqk,bkd->bqd"}> : () -> ()
    %cst_17 = arith.constant dense<0.000000e+00> : vector<2x8x32xf32>
    %56 = tpu.matmul %55, %41, %cst_17 {dimension_numbers = #tpu.dot_dimension_numbers<[2], [1], [1], [2], [0, 0, 0, 1, 1, 2], [0], [0]>} : vector<2x8x8xbf16>, vector<2x8x32xbf16>, vector<2x8x32xf32> -> vector<2x8x32xf32>
    "tpu.trace_stop"() : () -> ()
    %57 = arith.addf %35, %56 : vector<2x8x32xf32>
    %58 = vector.extract_strided_slice %28 {offsets = [0, 0, 32], sizes = [2, 8, 32], strides = [1, 1, 1]} : vector<2x8x192xf32> to vector<2x8x32xf32>
    %59 = arith.truncf %58 : vector<2x8x32xf32> to vector<2x8x32xbf16>
    %60 = vector.extract_strided_slice %28 {offsets = [0, 0, 96], sizes = [2, 8, 32], strides = [1, 1, 1]} : vector<2x8x192xf32> to vector<2x8x32xf32>
    %61 = arith.truncf %60 : vector<2x8x32xf32> to vector<2x8x32xbf16>
    %62 = vector.extract_strided_slice %28 {offsets = [0, 0, 160], sizes = [2, 8, 32], strides = [1, 1, 1]} : vector<2x8x192xf32> to vector<2x8x32xf32>
    %63 = arith.truncf %62 : vector<2x8x32xf32> to vector<2x8x32xbf16>
    "tpu.trace_start"() <{level = 10 : i32, message = "bqd,bkd->bqk"}> : () -> ()
    %cst_18 = arith.constant dense<0.000000e+00> : vector<2x8x8xf32>
    %64 = tpu.matmul %59, %61, %cst_18 {dimension_numbers = #tpu.dot_dimension_numbers<[2], [2], [1], [1], [0, 0, 0, 1, 1, 1], [0], [0]>} : vector<2x8x32xbf16>, vector<2x8x32xbf16>, vector<2x8x8xf32> -> vector<2x8x8xf32>
    %cst_19 = arith.constant -1.000000e+30 : f32
    "tpu.trace_stop"() : () -> ()
    %65 = vector.broadcast %cst_19 : f32 to vector<2x8x8xf32>
    %66 = arith.select %34, %64, %65 : vector<2x8x8xi1>, vector<2x8x8xf32>
    %cst_20 = arith.constant dense<0xFF800000> : vector<2x8xf32>
    %67 = vector.multi_reduction <maximumf>, %66, %cst_20 [2] : vector<2x8x8xf32> to vector<2x8xf32>
    %68 = vector.shape_cast %67 : vector<2x8xf32> to vector<2x8x1xf32>
    %69 = vector.broadcast %68 : vector<2x8x1xf32> to vector<2x8x8xf32>
    %70 = arith.subf %66, %69 : vector<2x8x8xf32>
    %71 = math.exp %70 : vector<2x8x8xf32>
    %cst_21 = arith.constant dense<0.000000e+00> : vector<2x8xf32>
    %72 = vector.multi_reduction <add>, %71, %cst_21 [2] : vector<2x8x8xf32> to vector<2x8xf32>
    %73 = vector.shape_cast %72 : vector<2x8xf32> to vector<2x8x1xf32>
    %74 = tpu.reciprocal %73 {approx = true} : vector<2x8x1xf32> -> vector<2x8x1xf32>
    %75 = vector.broadcast %74 : vector<2x8x1xf32> to vector<2x8x8xf32>
    %76 = arith.mulf %71, %75 : vector<2x8x8xf32>
    %77 = arith.truncf %76 : vector<2x8x8xf32> to vector<2x8x8xbf16>
    "tpu.trace_start"() <{level = 10 : i32, message = "bqk,bkd->bqd"}> : () -> ()
    %cst_22 = arith.constant dense<0.000000e+00> : vector<2x8x32xf32>
    %78 = tpu.matmul %77, %63, %cst_22 {dimension_numbers = #tpu.dot_dimension_numbers<[2], [1], [1], [2], [0, 0, 0, 1, 1, 2], [0], [0]>} : vector<2x8x8xbf16>, vector<2x8x32xbf16>, vector<2x8x32xf32> -> vector<2x8x32xf32>
    "tpu.trace_stop"() : () -> ()
    %79 = arith.addf %57, %78 : vector<2x8x32xf32>
    %80 = vector.shape_cast %79 : vector<2x8x32xf32> to vector<16x32xf32>
    %81 = arith.addf %80, %0 : vector<16x32xf32>
    %c0_23 = arith.constant 0 : index
    %c0_24 = arith.constant 0 : index
    %82 = vector.load %arg5[%c0_23, %c0_24] : memref<1x32xf32, #tpu.memory_space<vmem>>, vector<1x32xf32>
    %c0_25 = arith.constant 0 : index
    %c0_26 = arith.constant 0 : index
    %83 = vector.load %arg6[%c0_25, %c0_26] : memref<1x32xf32, #tpu.memory_space<vmem>>, vector<1x32xf32>
    %cst_27 = arith.constant dense<0.000000e+00> : vector<16xf32>
    %84 = vector.multi_reduction <add>, %81, %cst_27 [1] : vector<16x32xf32> to vector<16xf32>
    %85 = vector.shape_cast %84 : vector<16xf32> to vector<16x1xf32>
    %cst_28 = arith.constant 3.200000e+01 : f32
    %86 = vector.broadcast %cst_28 : f32 to vector<16x1xf32>
    %87 = arith.divf %85, %86 : vector<16x1xf32>
    %88 = vector.broadcast %87 : vector<16x1xf32> to vector<16x32xf32>
    %89 = arith.subf %81, %88 : vector<16x32xf32>
    %90 = arith.mulf %89, %89 : vector<16x32xf32>
    %cst_29 = arith.constant dense<0.000000e+00> : vector<16xf32>
    %91 = vector.multi_reduction <add>, %90, %cst_29 [1] : vector<16x32xf32> to vector<16xf32>
    %92 = vector.shape_cast %91 : vector<16xf32> to vector<16x1xf32>
    %cst_30 = arith.constant 3.200000e+01 : f32
    %93 = vector.broadcast %cst_30 : f32 to vector<16x1xf32>
    %94 = arith.divf %92, %93 : vector<16x1xf32>
    %95 = vector.broadcast %87 : vector<16x1xf32> to vector<16x32xf32>
    %96 = arith.subf %81, %95 : vector<16x32xf32>
    %cst_31 = arith.constant 9.99999974E-6 : f32
    %97 = vector.broadcast %cst_31 : f32 to vector<16x1xf32>
    %98 = arith.addf %94, %97 : vector<16x1xf32>
    %99 = math.rsqrt %98 : vector<16x1xf32>
    %100 = vector.broadcast %99 : vector<16x1xf32> to vector<16x32xf32>
    %101 = arith.mulf %96, %100 : vector<16x32xf32>
    %102 = vector.broadcast %82 : vector<1x32xf32> to vector<16x32xf32>
    %103 = arith.mulf %101, %102 : vector<16x32xf32>
    %104 = vector.broadcast %83 : vector<1x32xf32> to vector<16x32xf32>
    %105 = arith.addf %103, %104 : vector<16x32xf32>
    %106 = arith.truncf %105 : vector<16x32xf32> to vector<16x32xbf16>
    %c0_32 = arith.constant 0 : index
    %c0_33 = arith.constant 0 : index
    %107 = vector.load %arg7[%c0_32, %c0_33] : memref<32x128xbf16, #tpu.memory_space<vmem>>, vector<32x128xbf16>
    %cst_34 = arith.constant dense<0.000000e+00> : vector<16x128xf32>
    %108 = tpu.matmul %106, %107, %cst_34 {dimension_numbers = #tpu.dot_dimension_numbers<[1], [0], [0], [1], [0, 0, 1, 1], [], []>} : vector<16x32xbf16>, vector<32x128xbf16>, vector<16x128xf32> -> vector<16x128xf32>
    %c0_35 = arith.constant 0 : index
    %c0_36 = arith.constant 0 : index
    %109 = vector.load %arg8[%c0_35, %c0_36] : memref<1x128xf32, #tpu.memory_space<vmem>>, vector<1x128xf32>
    %110 = vector.broadcast %109 : vector<1x128xf32> to vector<16x128xf32>
    %111 = arith.addf %108, %110 : vector<16x128xf32>
    %cst_37 = arith.constant 0.000000e+00 : f32
    %112 = vector.broadcast %cst_37 : f32 to vector<16x128xf32>
    %113 = arith.maximumf %111, %112 : vector<16x128xf32>
    %114 = arith.truncf %113 : vector<16x128xf32> to vector<16x128xbf16>
    %c0_38 = arith.constant 0 : index
    %c0_39 = arith.constant 0 : index
    %115 = vector.load %arg9[%c0_38, %c0_39] : memref<128x32xbf16, #tpu.memory_space<vmem>>, vector<128x32xbf16>
    %cst_40 = arith.constant dense<0.000000e+00> : vector<16x32xf32>
    %116 = tpu.matmul %114, %115, %cst_40 {dimension_numbers = #tpu.dot_dimension_numbers<[1], [0], [0], [1], [0, 0, 1, 1], [], []>} : vector<16x128xbf16>, vector<128x32xbf16>, vector<16x32xf32> -> vector<16x32xf32>
    %c0_41 = arith.constant 0 : index
    %c0_42 = arith.constant 0 : index
    %117 = vector.load %arg10[%c0_41, %c0_42] : memref<1x32xf32, #tpu.memory_space<vmem>>, vector<1x32xf32>
    %118 = vector.broadcast %117 : vector<1x32xf32> to vector<16x32xf32>
    %119 = arith.addf %116, %118 : vector<16x32xf32>
    %120 = arith.addf %119, %105 : vector<16x32xf32>
    %c0_43 = arith.constant 0 : index
    %c0_44 = arith.constant 0 : index
    %121 = vector.load %arg11[%c0_43, %c0_44] : memref<16x32xf32, #tpu.memory_space<vmem>>, vector<16x32xf32>
    tpu.vector_store %arg11[%c0_43, %c0_44], %120 {strides = array<i32>} : memref<16x32xf32, #tpu.memory_space<vmem>>, vector<16x32xf32>,
    return
  }
  func.func @transform_0(%arg0: i32) -> (i32, i32) {
    %c0_i32 = arith.constant 0 : i32
    %c0_i32_0 = arith.constant 0 : i32
    %c0_i32_1 = arith.constant 0 : i32
    return %c0_i32, %c0_i32_0 : i32, i32
  }
  func.func @transform_1(%arg0: i32) -> (i32, i32) {
    %c0_i32 = arith.constant 0 : i32
    %c0_i32_0 = arith.constant 0 : i32
    %c0_i32_1 = arith.constant 0 : i32
    return %c0_i32, %c0_i32_0 : i32, i32
  }
  func.func @transform_2(%arg0: i32) -> (i32, i32) {
    %c0_i32 = arith.constant 0 : i32
    %c0_i32_0 = arith.constant 0 : i32
    %c0_i32_1 = arith.constant 0 : i32
    return %c0_i32, %c0_i32_0 : i32, i32
  }
  func.func @transform_3(%arg0: i32) -> (i32, i32) {
    %c0_i32 = arith.constant 0 : i32
    %c0_i32_0 = arith.constant 0 : i32
    %c0_i32_1 = arith.constant 0 : i32
    return %c0_i32, %c0_i32_0 : i32, i32
  }
  func.func @transform_4(%arg0: i32) -> (i32, i32) {
    %c0_i32 = arith.constant 0 : i32
    %c0_i32_0 = arith.constant 0 : i32
    %c0_i32_1 = arith.constant 0 : i32
    return %c0_i32, %c0_i32_0 : i32, i32
  }
  func.func @transform_5(%arg0: i32) -> (i32, i32) {
    %c0_i32 = arith.constant 0 : i32
    %c0_i32_0 = arith.constant 0 : i32
    %c0_i32_1 = arith.constant 0 : i32
    return %c0_i32, %c0_i32_0 : i32, i32
  }
  func.func @transform_6(%arg0: i32) -> (i32, i32) {
    %c0_i32 = arith.constant 0 : i32
    %c0_i32_0 = arith.constant 0 : i32
    %c0_i32_1 = arith.constant 0 : i32
    return %c0_i32, %c0_i32_0 : i32, i32
  }
  func.func @transform_7(%arg0: i32) -> (i32, i32) {
    %c0_i32 = arith.constant 0 : i32
    %c0_i32_0 = arith.constant 0 : i32
    %c0_i32_1 = arith.constant 0 : i32
    return %c0_i32, %c0_i32_0 : i32, i32
  }
  func.func @transform_8(%arg0: i32) -> (i32, i32) {
    %c0_i32 = arith.constant 0 : i32
    %c0_i32_0 = arith.constant 0 : i32
    %c0_i32_1 = arith.constant 0 : i32
    return %c0_i32, %c0_i32_0 : i32, i32
  }
  func.func @transform_9(%arg0: i32) -> (i32, i32) {
    %c0_i32 = arith.constant 0 : i32
    %c0_i32_0 = arith.constant 0 : i32
    %c0_i32_1 = arith.constant 0 : i32
    return %c0_i32, %c0_i32_0 : i32, i32
  }
  func.func @transform_10(%arg0: i32) -> (i32, i32) {
    %c0_i32 = arith.constant 0 : i32
    %c0_i32_0 = arith.constant 0 : i32
    %c0_i32_1 = arith.constant 0 : i32
    return %c0_i32, %c0_i32_0 : i32, i32
  }
}

</mosaic_0001>

<llo_original>
// kernel: tpu_custom_call.1
$region0: #{tpu_custom_call.1}
  #allocation0 [shape = 'u32[]', space=smem, size = 0x4, offset = 0x4, fixed_abs, tag = 'smem constant byte address 0x4 - core index']
  #allocation1 [shape = 'u32[144,128]{1,0:T(1,128)}', space=vmem, size = 0x12000, scoped, tag = 'internal scratch']
  %s0 = inlined_call_operand.vmem [shape: f32[16,32], index: 0, kind: input, shape index: {}]
  %s1 = inlined_call_operand.vmem [shape: f32[1,32], index: 1, kind: input, shape index: {}]
  %s2 = inlined_call_operand.vmem [shape: f32[1,32], index: 2, kind: input, shape index: {}]
  %s3 = inlined_call_operand.vmem [shape: bf16[32,192], index: 3, kind: input, shape index: {}]
  %s4 = inlined_call_operand.vmem [shape: f32[1,32], index: 4, kind: input, shape index: {}]
  %s5 = inlined_call_operand.vmem [shape: f32[1,32], index: 5, kind: input, shape index: {}]
  %s6 = inlined_call_operand.vmem [shape: bf16[32,128], index: 6, kind: input, shape index: {}]
  %s7 = inlined_call_operand.vmem [shape: f32[1,128], index: 7, kind: input, shape index: {}]
  %s8 = inlined_call_operand.vmem [shape: bf16[128,32], index: 8, kind: input, shape index: {}]
  %s9 = inlined_call_operand.vmem [shape: f32[1,32], index: 9, kind: input, shape index: {}]
  %s10 = inlined_call_operand.hbm [shape: f32[16,32], index: 10, kind: output, shape index: {}]
  %s11 = sld [smem:[#allocation0]]
  $region50: #{tpu_custom_call.1} parent=0
    _
  %s13 = ssub.s32 1, %s11
  %s14 = scalar_select 0, %s13, %s11
  $region1: #{tpu_custom_call.1} parent=0
    #allocation2 [shape = 'u8[8192]{0}', space=vmem, size = 0x2000, scoped, tag = 'output window, operand 0, single buffered']
    #allocation3 [shape = 's32[1]{0}', space=sflag, size = 0x4, scoped, tag = 'scoped memory for tpu_custom_call.1']
    %15 = vsyncpa [#allocation3], 0
    // Predicated region
    $region2: #{tpu_custom_call.1} parent=1 // pred_check
      _
    $region3: #{tpu_custom_call.1} parent=1 // pred_check_branch
      %17 = sbr.rel (0) target = $region5
    $region4: #{tpu_custom_call.1} parent=1 // pred_region
      _
    $region5: #{tpu_custom_call.1} parent=1 // pred_fallthru
      _
    // Predicated region
    $region6: #{tpu_custom_call.1} parent=1 // pred_check
      _
    $region7: #{tpu_custom_call.1} parent=1 // pred_check_branch
      %19 = sbr.rel (0) target = $region9
    $region8: #{tpu_custom_call.1} parent=1 // pred_region
      _
    $region9: #{tpu_custom_call.1} parent=1 // pred_fallthru
      _
    // Predicated region
    $region10: #{tpu_custom_call.1} parent=1 // pred_check
      _
    $region11: #{tpu_custom_call.1} parent=1 // pred_check_branch
      %21 = sbr.rel (0) target = $region13
    $region12: #{tpu_custom_call.1} parent=1 // pred_region
      _
    $region13: #{tpu_custom_call.1} parent=1 // pred_fallthru
      _
    // Predicated region
    $region14: #{tpu_custom_call.1} parent=1 // pred_check
      _
    $region15: #{tpu_custom_call.1} parent=1 // pred_check_branch
      %23 = sbr.rel (0) target = $region17
    $region16: #{tpu_custom_call.1} parent=1 // pred_region
      _
    $region17: #{tpu_custom_call.1} parent=1 // pred_fallthru
      _
    // Predicated region
    $region18: #{tpu_custom_call.1} parent=1 // pred_check
      _
    $region19: #{tpu_custom_call.1} parent=1 // pred_check_branch
      %25 = sbr.rel (0) target = $region21
    $region20: #{tpu_custom_call.1} parent=1 // pred_region
      _
    $region21: #{tpu_custom_call.1} parent=1 // pred_fallthru
      _
    // Predicated region
    $region22: #{tpu_custom_call.1} parent=1 // pred_check
      _
    $region23: #{tpu_custom_call.1} parent=1 // pred_check_branch
      %27 = sbr.rel (0) target = $region25
    $region24: #{tpu_custom_call.1} parent=1 // pred_region
      _
    $region25: #{tpu_custom_call.1} parent=1 // pred_fallthru
      _
    // Predicated region
    $region26: #{tpu_custom_call.1} parent=1 // pred_check
      _
    $region27: #{tpu_custom_call.1} parent=1 // pred_check_branch
      %29 = sbr.rel (0) target = $region29
    $region28: #{tpu_custom_call.1} parent=1 // pred_region
      _
    $region29: #{tpu_custom_call.1} parent=1 // pred_fallthru
      _
    // Predicated region
    $region30: #{tpu_custom_call.1} parent=1 // pred_check
      _
    $region31: #{tpu_custom_call.1} parent=1 // pred_check_branch
      %31 = sbr.rel (0) target = $region33
    $region32: #{tpu_custom_call.1} parent=1 // pred_region
      _
    $region33: #{tpu_custom_call.1} parent=1 // pred_fallthru
      _
    // Predicated region
    $region34: #{tpu_custom_call.1} parent=1 // pred_check
      _
    $region35: #{tpu_custom_call.1} parent=1 // pred_check_branch
      %33 = sbr.rel (0) target = $region37
    $region36: #{tpu_custom_call.1} parent=1 // pred_region
      _
    $region37: #{tpu_custom_call.1} parent=1 // pred_fallthru
      _
    // Predicated region
    $region38: #{tpu_custom_call.1} parent=1 // pred_check
      _
    $region39: #{tpu_custom_call.1} parent=1 // pred_check_branch
      %35 = sbr.rel (0) target = $region41
    $region40: #{tpu_custom_call.1} parent=1 // pred_region
      _
    $region41: #{tpu_custom_call.1} parent=1 // pred_fallthru
      _
    %v37 = vld [vmem:[%s0] sm:$0xff]
    %v38 = vld [vmem:[%s0 + $0x8] sm:$0xff]
    %v39 = vld [vmem:[%s1] sm:$0x1]
    %v40 = vld [vmem:[%s2] sm:$0x1]
    %vm41 = vcmask 261120
    %v42 = vsel %vm41, %v37, 0.0
    %43 = vadd.xlane.f32.xlu0 %v42
    %v44 = vpop.xlane.xlu0 %43
    %v45 = vsel %vm41, %v38, 0.0
    %46 = vadd.xlane.f32.xlu0 %v45
    %v47 = vpop.xlane.xlu0 %46
    %v48 = vrcp.pop 32.0
    %v49 = vmul.f32 %v44, %v48
    %v50 = vmul.f32 %v47, %v48
    %v51 = vsub.f32 %v37, %v49
    %v52 = vsub.f32 %v38, %v50
    %v53 = vmul.f32 %v51, %v51
    %v54 = vmul.f32 %v52, %v52
    %v55 = vsel %vm41, %v53, 0.0
    %56 = vadd.xlane.f32.xlu0 %v55
    %v57 = vpop.xlane.xlu0 %56
    %v58 = vsel %vm41, %v54, 0.0
    %59 = vadd.xlane.f32.xlu0 %v58
    %v60 = vpop.xlane.xlu0 %59
    %v61 = vmul.f32 %v57, %v48
    %v62 = vmul.f32 %v60, %v48
    %v63 = vadd.f32 %v61, 1e-05
    %v64 = vadd.f32 %v62, 1e-05
    %v65 = vrsqrt.pop %v63
    %v66 = vrsqrt.pop %v64
    %v67 = vmul.f32 %v51, %v65
    %v68 = vmul.f32 %v52, %v66
    %v70 = vlaneseq
    %v71 = vshrl.u32 %v70, 7
    %v72 = vsub.s32 0, %v71
    %v73 = vrot.slane %v39, %v72
    %v75 = vmul.f32 %v67, %v73
    %v76 = vmul.f32 %v68, %v73
    %v78 = vlaneseq
    %v79 = vshrl.u32 %v78, 7
    %v80 = vsub.s32 0, %v79
    %v81 = vrot.slane %v40, %v80
    %v83 = vadd.f32 %v75, %v81
    %v84 = vadd.f32 %v76, %v81
    %v85 = vpack.c.bf16 %v84, %v83
    %v86 = vld [vmem:[%s3] sm:$0xff]
    %v87 = vld [vmem:[%s3 + $0x8] sm:$0xff]
    %v88 = vld [vmem:[%s3 + $0x10] sm:$0xff]
    %v89 = vld [vmem:[%s3 + $0x18] sm:$0xff]
    %v94 = vunpack.c.l.b16 %v86
    %v95 = vunpack.c.h.b16 %v86
    %v96 = vunpack.c.l.b16 %v87
    %v97 = vunpack.c.h.b16 %v87
    %v98 = vunpack.c.l.b16 %v88
    %v99 = vunpack.c.h.b16 %v88
    %v100 = vunpack.c.l.b16 %v89
    %v101 = vunpack.c.h.b16 %v89
    %v102 = vpack.c.b16 %v96, %v94
    %v103 = vpack.c.b16 %v97, %v95
    %v104 = vpack.c.b16 %v100, %v98
    %v105 = vpack.c.b16 %v101, %v99
    %v111 = vsel %vm41, %v85, 0
    %113 = vmatprep.subr.bf16.mxu0 %v103
    %114 = vmatpush1.bf16.msra.mxu0 %v102
    %115 = vmatprep.subr.bf16.mxu0 %v105
    %116 = vmatpush1.bf16.msra.mxu0 %v104
    %117 = vmatprep.subr.bf16.mxu0 0
    %118 = vmatpush1.bf16.msra.mxu0 0
    %119 = vmatprep.subr.bf16.mxu0 0
    %120 = vmatpush1.bf16.msra.mxu0 0
    %121 = vmatprep.subr.bf16.mxu0 0
    %122 = vmatpush1.bf16.msra.mxu0 0
    %123 = vmatprep.subr.bf16.mxu0 0
    %124 = vmatpush1.bf16.msra.mxu0 0
    %125 = vmatprep.subr.bf16.mxu0 0
    %126 = vmatpush1.bf16.msra.mxu0 0
    %127 = vmatprep.subr.bf16.mxu0 0
    %128 = vmatpush1.bf16.msra.mxu0 0
    %129 = vmatprep.subr.bf16.mxu0 0
    %130 = vmatpush1.bf16.msra.mxu0 0
    %131 = vmatprep.subr.bf16.mxu0 0
    %132 = vmatpush1.bf16.msra.mxu0 0
    %133 = vmatprep.subr.bf16.mxu0 0
    %134 = vmatpush1.bf16.msra.mxu0 0
    %135 = vmatprep.subr.bf16.mxu0 0
    %136 = vmatpush1.bf16.msra.mxu0 0
    %137 = vmatprep.subr.bf16.mxu0 0
    %138 = vmatpush1.bf16.msra.mxu0 0
    %139 = vmatprep.subr.bf16.mxu0 0
    %140 = vmatpush1.bf16.msra.mxu0 0
    %141 = vmatprep.subr.bf16.mxu0 0
    %142 = vmatpush1.bf16.msra.mxu0 0
    %143 = vmatprep.subr.bf16.mxu0 0
    %144 = vmatpush1.bf16.msra.mxu0 0
    %145 = vmatprep.mubr.bf16.mxu0 0
    %146 = vmatmul.mubr.bf16.gmra.mrb[0].mxu0 %v111
    %v147 = vpop.f32.mrb[0].mxu0
    %v148 = vadd.f32 0.0, %v147
    %v149 = vpop.f32.mrb[0].mxu0
    %v150 = vadd.f32 0.0, %v149
    %v151 = vpop.f32.mrb[0].mxu0
    %v152 = vadd.f32 0.0, %v151
    %v153 = vpop.f32.mrb[0].mxu0
    %v154 = vadd.f32 0.0, %v153
    %155 = vdwg.mxu0
    %v156 = vlaneseq
    %v157 = vshrl.u32 %v156, 7
    %v158 = vlaneseq
    %v159 = vand.u32 %v158, 127
    %vm160 = vcmp.ge.s32.totalorder %v157, %v159
    %v161 = vsel %vm160, 1, 0
    %vm162 = vcmp.eq.s32.totalorder %v161, 1
    %v163 = vpack.c.bf16 %v148, %v148
    %v164 = vpack.c.bf16 %v152, %v152
    %v165 = vpack.c.bf16 %v150, %v150
    %v166 = vpack.c.bf16 %v154, %v154
    %168 = vrot.lane.b32.xlu0 %v163, 64
    %v169 = vpop.permute.xlu0 %168
    %v171 = vsel %vm41, %v163, 0
    %v174 = vsel %vm41, %v169, 0
    %176 = vmatprep.subr.bf16.mxu0 0
    %177 = vmatpush1.bf16.xpose.msra.mxu0 %v174
    %178 = vmatprep.subr.bf16.mxu0 0
    %179 = vmatpush1.bf16.xpose.msra.mxu0 0
    %180 = vmatprep.subr.bf16.mxu0 0
    %181 = vmatpush1.bf16.xpose.msra.mxu0 0
    %182 = vmatprep.subr.bf16.mxu0 0
    %183 = vmatpush1.bf16.xpose.msra.mxu0 0
    %184 = vmatprep.subr.bf16.mxu0 0
    %185 = vmatpush1.bf16.xpose.msra.mxu0 0
    %186 = vmatprep.subr.bf16.mxu0 0
    %187 = vmatpush1.bf16.xpose.msra.mxu0 0
    %188 = vmatprep.subr.bf16.mxu0 0
    %189 = vmatpush1.bf16.xpose.msra.mxu0 0
    %190 = vmatprep.subr.bf16.mxu0 0
    %191 = vmatpush1.bf16.xpose.msra.mxu0 0
    %192 = vmatprep.subr.bf16.mxu0 0
    %193 = vmatpush1.bf16.xpose.msra.mxu0 0
    %194 = vmatprep.subr.bf16.mxu0 0
    %195 = vmatpush1.bf16.xpose.msra.mxu0 0
    %196 = vmatprep.subr.bf16.mxu0 0
    %197 = vmatpush1.bf16.xpose.msra.mxu0 0
    %198 = vmatprep.subr.bf16.mxu0 0
    %199 = vmatpush1.bf16.xpose.msra.mxu0 0
    %200 = vmatprep.subr.bf16.mxu0 0
    %201 = vmatpush1.bf16.xpose.msra.mxu0 0
    %202 = vmatprep.subr.bf16.mxu0 0
    %203 = vmatpush1.bf16.xpose.msra.mxu0 0
    %204 = vmatprep.subr.bf16.mxu0 0
    %205 = vmatpush1.bf16.xpose.msra.mxu0 0
    %206 = vmatprep.subr.bf16.mxu0 0
    %207 = vmatpush1.bf16.xpose.msra.mxu0 0
    %208 = vmatprep.mubr.bf16.mxu0 0
    %209 = vmatmul.mubr.bf16.gmra.mrb[0].mxu0 %v171
    %v210 = vpop.f32.mrb[0].mxu0
    %v211 = vadd.f32 0.0, %v210
    %v212 = vpop.f32.mrb[0].mxu0
    %v213 = vpop.f32.mrb[0].mxu0
    %v214 = vpop.f32.mrb[0].mxu0
    %215 = vdwg.mxu0
    %217 = vrot.lane.b32.xlu0 %v164, 64
    %v218 = vpop.permute.xlu0 %217
    %v220 = vsel %vm41, %v164, 0
    %v223 = vsel %vm41, %v218, 0
    %225 = vmatprep.subr.bf16.mxu0 0
    %226 = vmatpush1.bf16.xpose.msra.mxu0 %v223
    %227 = vmatprep.subr.bf16.mxu0 0
    %228 = vmatpush1.bf16.xpose.msra.mxu0 0
    %229 = vmatprep.subr.bf16.mxu0 0
    %230 = vmatpush1.bf16.xpose.msra.mxu0 0
    %231 = vmatprep.subr.bf16.mxu0 0
    %232 = vmatpush1.bf16.xpose.msra.mxu0 0
    %233 = vmatprep.subr.bf16.mxu0 0
    %234 = vmatpush1.bf16.xpose.msra.mxu0 0
    %235 = vmatprep.subr.bf16.mxu0 0
    %236 = vmatpush1.bf16.xpose.msra.mxu0 0
    %237 = vmatprep.subr.bf16.mxu0 0
    %238 = vmatpush1.bf16.xpose.msra.mxu0 0
    %239 = vmatprep.subr.bf16.mxu0 0
    %240 = vmatpush1.bf16.xpose.msra.mxu0 0
    %241 = vmatprep.subr.bf16.mxu0 0
    %242 = vmatpush1.bf16.xpose.msra.mxu0 0
    %243 = vmatprep.subr.bf16.mxu0 0
    %244 = vmatpush1.bf16.xpose.msra.mxu0 0
    %245 = vmatprep.subr.bf16.mxu0 0
    %246 = vmatpush1.bf16.xpose.msra.mxu0 0
    %247 = vmatprep.subr.bf16.mxu0 0
    %248 = vmatpush1.bf16.xpose.msra.mxu0 0
    %249 = vmatprep.subr.bf16.mxu0 0
    %250 = vmatpush1.bf16.xpose.msra.mxu0 0
    %251 = vmatprep.subr.bf16.mxu0 0
    %252 = vmatpush1.bf16.xpose.msra.mxu0 0
    %253 = vmatprep.subr.bf16.mxu0 0
    %254 = vmatpush1.bf16.xpose.msra.mxu0 0
    %255 = vmatprep.subr.bf16.mxu0 0
    %256 = vmatpush1.bf16.xpose.msra.mxu0 0
    %257 = vmatprep.mubr.bf16.mxu0 0
    %258 = vmatmul.mubr.bf16.gmra.mrb[0].mxu0 %v220
    %v259 = vpop.f32.mrb[0].mxu0
    %v260 = vadd.f32 0.0, %v259
    %v261 = vpop.f32.mrb[0].mxu0
    %v262 = vpop.f32.mrb[0].mxu0
    %v263 = vpop.f32.mrb[0].mxu0
    %264 = vdwg.mxu0
    %v265 = vsel %vm162, %v211, -1e+30
    %v266 = vsel %vm162, %v260, -1e+30
    %vm267 = vcmask 64512
    %v268 = vsel %vm267, %v265, -inf
    %269 = vmax.xlane.f32.xlu0 %v268
    %v270 = vpop.xlane.xlu0 %269
    %v271 = vsel %vm267, %v266, -inf
    %272 = vmax.xlane.f32.xlu0 %v271
    %v273 = vpop.xlane.xlu0 %272
    %v274 = vsub.f32 %v265, %v270
    %v275 = vsub.f32 %v266, %v273
    %v276 = vmul.f32 %v274, 1.442695
    %v277 = vpow.pop %v276
    %v278 = vmul.f32 %v275, 1.442695
    %v279 = vpow.pop %v278
    %v280 = vsel %vm267, %v277, 0.0
    %281 = vadd.xlane.f32.xlu0 %v280
    %v282 = vpop.xlane.xlu0 %281
    %v283 = vsel %vm267, %v279, 0.0
    %284 = vadd.xlane.f32.xlu0 %v283
    %v285 = vpop.xlane.xlu0 %284
    %v286 = vrcp.pop %v282
    %v287 = vrcp.pop %v285
    %v288 = vmul.f32 %v277, %v286
    %v289 = vmul.f32 %v279, %v287
    %v290 = vpack.c.bf16 %v288, %v288
    %v291 = vpack.c.bf16 %v289, %v289
    %292 = vrot.lane.b32.xlu0 %v163, 96
    %v293 = vpop.permute.xlu0 %292
    %294 = vrot.lane.b32.xlu0 %v163, 32
    %v295 = vpop.permute.xlu0 %294
    %v297 = vsel %vm41, %v293, 0
    %v300 = vsel %vm41, %v295, 0
    %302 = vmatprep.subr.bf16.mxu0 0
    %303 = vmatpush1.bf16.xpose.msra.mxu0 %v300
    %304 = vmatprep.subr.bf16.mxu0 0
    %305 = vmatpush1.bf16.xpose.msra.mxu0 0
    %306 = vmatprep.subr.bf16.mxu0 0
    %307 = vmatpush1.bf16.xpose.msra.mxu0 0
    %308 = vmatprep.subr.bf16.mxu0 0
    %309 = vmatpush1.bf16.xpose.msra.mxu0 0
    %310 = vmatprep.subr.bf16.mxu0 0
    %311 = vmatpush1.bf16.xpose.msra.mxu0 0
    %312 = vmatprep.subr.bf16.mxu0 0
    %313 = vmatpush1.bf16.xpose.msra.mxu0 0
    %314 = vmatprep.subr.bf16.mxu0 0
    %315 = vmatpush1.bf16.xpose.msra.mxu0 0
    %316 = vmatprep.subr.bf16.mxu0 0
    %317 = vmatpush1.bf16.xpose.msra.mxu0 0
    %318 = vmatprep.subr.bf16.mxu0 0
    %319 = vmatpush1.bf16.xpose.msra.mxu0 0
    %320 = vmatprep.subr.bf16.mxu0 0
    %321 = vmatpush1.bf16.xpose.msra.mxu0 0
    %322 = vmatprep.subr.bf16.mxu0 0
    %323 = vmatpush1.bf16.xpose.msra.mxu0 0
    %324 = vmatprep.subr.bf16.mxu0 0
    %325 = vmatpush1.bf16.xpose.msra.mxu0 0
    %326 = vmatprep.subr.bf16.mxu0 0
    %327 = vmatpush1.bf16.xpose.msra.mxu0 0
    %328 = vmatprep.subr.bf16.mxu0 0
    %329 = vmatpush1.bf16.xpose.msra.mxu0 0
    %330 = vmatprep.subr.bf16.mxu0 0
    %331 = vmatpush1.bf16.xpose.msra.mxu0 0
    %332 = vmatprep.subr.bf16.mxu0 0
    %333 = vmatpush1.bf16.xpose.msra.mxu0 0
    %334 = vmatprep.mubr.bf16.mxu0 0
    %335 = vmatmul.mubr.bf16.gmra.mrb[0].mxu0 %v297
    %v336 = vpop.f32.mrb[0].mxu0
    %v337 = vadd.f32 0.0, %v336
    %v338 = vpop.f32.mrb[0].mxu0
    %v339 = vpop.f32.mrb[0].mxu0
    %v340 = vpop.f32.mrb[0].mxu0
    %341 = vdwg.mxu0
    %342 = vrot.lane.b32.xlu0 %v164, 96
    %v343 = vpop.permute.xlu0 %342
    %344 = vrot.lane.b32.xlu0 %v164, 32
    %v345 = vpop.permute.xlu0 %344
    %v347 = vsel %vm41, %v343, 0
    %v350 = vsel %vm41, %v345, 0
    %352 = vmatprep.subr.bf16.mxu0 0
    %353 = vmatpush1.bf16.xpose.msra.mxu0 %v350
    %354 = vmatprep.subr.bf16.mxu0 0
    %355 = vmatpush1.bf16.xpose.msra.mxu0 0
    %356 = vmatprep.subr.bf16.mxu0 0
    %357 = vmatpush1.bf16.xpose.msra.mxu0 0
    %358 = vmatprep.subr.bf16.mxu0 0
    %359 = vmatpush1.bf16.xpose.msra.mxu0 0
    %360 = vmatprep.subr.bf16.mxu0 0
    %361 = vmatpush1.bf16.xpose.msra.mxu0 0
    %362 = vmatprep.subr.bf16.mxu0 0
    %363 = vmatpush1.bf16.xpose.msra.mxu0 0
    %364 = vmatprep.subr.bf16.mxu0 0
    %365 = vmatpush1.bf16.xpose.msra.mxu0 0
    %366 = vmatprep.subr.bf16.mxu0 0
    %367 = vmatpush1.bf16.xpose.msra.mxu0 0
    %368 = vmatprep.subr.bf16.mxu0 0
    %369 = vmatpush1.bf16.xpose.msra.mxu0 0
    %370 = vmatprep.subr.bf16.mxu0 0
    %371 = vmatpush1.bf16.xpose.msra.mxu0 0
    %372 = vmatprep.subr.bf16.mxu0 0
    %373 = vmatpush1.bf16.xpose.msra.mxu0 0
    %374 = vmatprep.subr.bf16.mxu0 0
    %375 = vmatpush1.bf16.xpose.msra.mxu0 0
    %376 = vmatprep.subr.bf16.mxu0 0
    %377 = vmatpush1.bf16.xpose.msra.mxu0 0
    %378 = vmatprep.subr.bf16.mxu0 0
    %379 = vmatpush1.bf16.xpose.msra.mxu0 0
    %380 = vmatprep.subr.bf16.mxu0 0
    %381 = vmatpush1.bf16.xpose.msra.mxu0 0
    %382 = vmatprep.subr.bf16.mxu0 0
    %383 = vmatpush1.bf16.xpose.msra.mxu0 0
    %384 = vmatprep.mubr.bf16.mxu0 0
    %385 = vmatmul.mubr.bf16.gmra.mrb[0].mxu0 %v347
    %v386 = vpop.f32.mrb[0].mxu0
    %v387 = vadd.f32 0.0, %v386
    %v388 = vpop.f32.mrb[0].mxu0
    %v389 = vpop.f32.mrb[0].mxu0
    %v390 = vpop.f32.mrb[0].mxu0
    %391 = vdwg.mxu0
    %v392 = vsel %vm162, %v337, -1e+30
    %v393 = vsel %vm162, %v387, -1e+30
    %v394 = vsel %vm267, %v392, -inf
    %395 = vmax.xlane.f32.xlu0 %v394
    %v396 = vpop.xlane.xlu0 %395
    %v397 = vsel %vm267, %v393, -inf
    %398 = vmax.xlane.f32.xlu0 %v397
    %v399 = vpop.xlane.xlu0 %398
    %v400 = vsub.f32 %v392, %v396
    %v401 = vsub.f32 %v393, %v399
    %v402 = vmul.f32 %v400, 1.442695
    %v403 = vpow.pop %v402
    %v404 = vmul.f32 %v401, 1.442695
    %v405 = vpow.pop %v404
    %v406 = vsel %vm267, %v403, 0.0
    %407 = vadd.xlane.f32.xlu0 %v406
    %v408 = vpop.xlane.xlu0 %407
    %v409 = vsel %vm267, %v405, 0.0
    %410 = vadd.xlane.f32.xlu0 %v409
    %v411 = vpop.xlane.xlu0 %410
    %v412 = vrcp.pop %v408
    %v413 = vrcp.pop %v411
    %v414 = vmul.f32 %v403, %v412
    %v415 = vmul.f32 %v405, %v413
    %v416 = vpack.c.bf16 %v414, %v414
    %v417 = vpack.c.bf16 %v415, %v415
    %419 = vrot.lane.b32.xlu0 %v165, 96
    %v420 = vpop.permute.xlu0 %419
    %v422 = vsel %vm267, %v416, 0
    %vm424 = vcmask 1043456
    %v426 = vsel %vm424, %v420, 0
    %428 = vmatprep.subr.bf16.mxu0 0
    %429 = vmatpush1.bf16.msra.mxu0 %v426
    %430 = vmatprep.subr.bf16.mxu0 0
    %431 = vmatpush1.bf16.msra.mxu0 0
    %432 = vmatprep.subr.bf16.mxu0 0
    %433 = vmatpush1.bf16.msra.mxu0 0
    %434 = vmatprep.subr.bf16.mxu0 0
    %435 = vmatpush1.bf16.msra.mxu0 0
    %436 = vmatprep.subr.bf16.mxu0 0
    %437 = vmatpush1.bf16.msra.mxu0 0
    %438 = vmatprep.subr.bf16.mxu0 0
    %439 = vmatpush1.bf16.msra.mxu0 0
    %440 = vmatprep.subr.bf16.mxu0 0
    %441 = vmatpush1.bf16.msra.mxu0 0
    %442 = vmatprep.subr.bf16.mxu0 0
    %443 = vmatpush1.bf16.msra.mxu0 0
    %444 = vmatprep.subr.bf16.mxu0 0
    %445 = vmatpush1.bf16.msra.mxu0 0
    %446 = vmatprep.subr.bf16.mxu0 0
    %447 = vmatpush1.bf16.msra.mxu0 0
    %448 = vmatprep.subr.bf16.mxu0 0
    %449 = vmatpush1.bf16.msra.mxu0 0
    %450 = vmatprep.subr.bf16.mxu0 0
    %451 = vmatpush1.bf16.msra.mxu0 0
    %452 = vmatprep.subr.bf16.mxu0 0
    %453 = vmatpush1.bf16.msra.mxu0 0
    %454 = vmatprep.subr.bf16.mxu0 0
    %455 = vmatpush1.bf16.msra.mxu0 0
    %456 = vmatprep.subr.bf16.mxu0 0
    %457 = vmatpush1.bf16.msra.mxu0 0
    %458 = vmatprep.subr.bf16.mxu0 0
    %459 = vmatpush1.bf16.msra.mxu0 0
    %460 = vmatprep.mubr.bf16.mxu0 0
    %461 = vmatmul.mubr.bf16.gmra.mrb[0].mxu0 %v422
    %v462 = vpop.f32.mrb[0].mxu0
    %v463 = vadd.f32 0.0, %v462
    %v464 = vpop.f32.mrb[0].mxu0
    %v465 = vpop.f32.mrb[0].mxu0
    %v466 = vpop.f32.mrb[0].mxu0
    %467 = vdwg.mxu0
    %469 = vrot.lane.b32.xlu0 %v166, 96
    %v470 = vpop.permute.xlu0 %469
    %v472 = vsel %vm267, %v417, 0
    %v475 = vsel %vm424, %v470, 0
    %477 = vmatprep.subr.bf16.mxu0 0
    %478 = vmatpush1.bf16.msra.mxu0 %v475
    %479 = vmatprep.subr.bf16.mxu0 0
    %480 = vmatpush1.bf16.msra.mxu0 0
    %481 = vmatprep.subr.bf16.mxu0 0
    %482 = vmatpush1.bf16.msra.mxu0 0
    %483 = vmatprep.subr.bf16.mxu0 0
    %484 = vmatpush1.bf16.msra.mxu0 0
    %485 = vmatprep.subr.bf16.mxu0 0
    %486 = vmatpush1.bf16.msra.mxu0 0
    %487 = vmatprep.subr.bf16.mxu0 0
    %488 = vmatpush1.bf16.msra.mxu0 0
    %489 = vmatprep.subr.bf16.mxu0 0
    %490 = vmatpush1.bf16.msra.mxu0 0
    %491 = vmatprep.subr.bf16.mxu0 0
    %492 = vmatpush1.bf16.msra.mxu0 0
    %493 = vmatprep.subr.bf16.mxu0 0
    %494 = vmatpush1.bf16.msra.mxu0 0
    %495 = vmatprep.subr.bf16.mxu0 0
    %496 = vmatpush1.bf16.msra.mxu0 0
    %497 = vmatprep.subr.bf16.mxu0 0
    %498 = vmatpush1.bf16.msra.mxu0 0
    %499 = vmatprep.subr.bf16.mxu0 0
    %500 = vmatpush1.bf16.msra.mxu0 0
    %501 = vmatprep.subr.bf16.mxu0 0
    %502 = vmatpush1.bf16.msra.mxu0 0
    %503 = vmatprep.subr.bf16.mxu0 0
    %504 = vmatpush1.bf16.msra.mxu0 0
    %505 = vmatprep.subr.bf16.mxu0 0
    %506 = vmatpush1.bf16.msra.mxu0 0
    %507 = vmatprep.subr.bf16.mxu0 0
    %508 = vmatpush1.bf16.msra.mxu0 0
    %509 = vmatprep.mubr.bf16.mxu0 0
    %510 = vmatmul.mubr.bf16.gmra.mrb[0].mxu0 %v472
    %v511 = vpop.f32.mrb[0].mxu0
    %v512 = vadd.f32 0.0, %v511
    %v513 = vpop.f32.mrb[0].mxu0
    %v514 = vpop.f32.mrb[0].mxu0
    %v515 = vpop.f32.mrb[0].mxu0
    %516 = vdwg.mxu0
    %v518 = vsel %vm267, %v290, 0
    %v521 = vsel %vm424, %v165, 0
    %523 = vmatprep.subr.bf16.mxu0 0
    %524 = vmatpush1.bf16.msra.mxu0 %v521
    %525 = vmatprep.subr.bf16.mxu0 0
    %526 = vmatpush1.bf16.msra.mxu0 0
    %527 = vmatprep.subr.bf16.mxu0 0
    %528 = vmatpush1.bf16.msra.mxu0 0
    %529 = vmatprep.subr.bf16.mxu0 0
    %530 = vmatpush1.bf16.msra.mxu0 0
    %531 = vmatprep.subr.bf16.mxu0 0
    %532 = vmatpush1.bf16.msra.mxu0 0
    %533 = vmatprep.subr.bf16.mxu0 0
    %534 = vmatpush1.bf16.msra.mxu0 0
    %535 = vmatprep.subr.bf16.mxu0 0
    %536 = vmatpush1.bf16.msra.mxu0 0
    %537 = vmatprep.subr.bf16.mxu0 0
    %538 = vmatpush1.bf16.msra.mxu0 0
    %539 = vmatprep.subr.bf16.mxu0 0
    %540 = vmatpush1.bf16.msra.mxu0 0
    %541 = vmatprep.subr.bf16.mxu0 0
    %542 = vmatpush1.bf16.msra.mxu0 0
    %543 = vmatprep.subr.bf16.mxu0 0
    %544 = vmatpush1.bf16.msra.mxu0 0
    %545 = vmatprep.subr.bf16.mxu0 0
    %546 = vmatpush1.bf16.msra.mxu0 0
    %547 = vmatprep.subr.bf16.mxu0 0
    %548 = vmatpush1.bf16.msra.mxu0 0
    %549 = vmatprep.subr.bf16.mxu0 0
    %550 = vmatpush1.bf16.msra.mxu0 0
    %551 = vmatprep.subr.bf16.mxu0 0
    %552 = vmatpush1.bf16.msra.mxu0 0
    %553 = vmatprep.subr.bf16.mxu0 0
    %554 = vmatpush1.bf16.msra.mxu0 0
    %555 = vmatprep.mubr.bf16.mxu0 0
    %556 = vmatmul.mubr.bf16.gmra.mrb[0].mxu0 %v518
    %v557 = vpop.f32.mrb[0].mxu0
    %v558 = vadd.f32 %v463, %v557
    %v559 = vpop.f32.mrb[0].mxu0
    %v560 = vpop.f32.mrb[0].mxu0
    %v561 = vpop.f32.mrb[0].mxu0
    %562 = vdwg.mxu0
    %v564 = vsel %vm267, %v291, 0
    %v567 = vsel %vm424, %v166, 0
    %569 = vmatprep.subr.bf16.mxu0 0
    %570 = vmatpush1.bf16.msra.mxu0 %v567
    %571 = vmatprep.subr.bf16.mxu0 0
    %572 = vmatpush1.bf16.msra.mxu0 0
    %573 = vmatprep.subr.bf16.mxu0 0
    %574 = vmatpush1.bf16.msra.mxu0 0
    %575 = vmatprep.subr.bf16.mxu0 0
    %576 = vmatpush1.bf16.msra.mxu0 0
    %577 = vmatprep.subr.bf16.mxu0 0
    %578 = vmatpush1.bf16.msra.mxu0 0
    %579 = vmatprep.subr.bf16.mxu0 0
    %580 = vmatpush1.bf16.msra.mxu0 0
    %581 = vmatprep.subr.bf16.mxu0 0
    %582 = vmatpush1.bf16.msra.mxu0 0
    %583 = vmatprep.subr.bf16.mxu0 0
    %584 = vmatpush1.bf16.msra.mxu0 0
    %585 = vmatprep.subr.bf16.mxu0 0
    %586 = vmatpush1.bf16.msra.mxu0 0
    %587 = vmatprep.subr.bf16.mxu0 0
    %588 = vmatpush1.bf16.msra.mxu0 0
    %589 = vmatprep.subr.bf16.mxu0 0
    %590 = vmatpush1.bf16.msra.mxu0 0
    %591 = vmatprep.subr.bf16.mxu0 0
    %592 = vmatpush1.bf16.msra.mxu0 0
    %593 = vmatprep.subr.bf16.mxu0 0
    %594 = vmatpush1.bf16.msra.mxu0 0
    %595 = vmatprep.subr.bf16.mxu0 0
    %596 = vmatpush1.bf16.msra.mxu0 0
    %597 = vmatprep.subr.bf16.mxu0 0
    %598 = vmatpush1.bf16.msra.mxu0 0
    %599 = vmatprep.subr.bf16.mxu0 0
    %600 = vmatpush1.bf16.msra.mxu0 0
    %601 = vmatprep.mubr.bf16.mxu0 0
    %602 = vmatmul.mubr.bf16.gmra.mrb[0].mxu0 %v564
    %v603 = vpop.f32.mrb[0].mxu0
    %v604 = vadd.f32 %v512, %v603
    %v605 = vpop.f32.mrb[0].mxu0
    %v606 = vpop.f32.mrb[0].mxu0
    %v607 = vpop.f32.mrb[0].mxu0
    %608 = vdwg.mxu0
    %v609 = vadd.f32 %v558, %v37
    %v610 = vadd.f32 %v604, %v38
    %v611 = vld [vmem:[%s4] sm:$0x1]
    %v612 = vld [vmem:[%s5] sm:$0x1]
    %v613 = vsel %vm41, %v609, 0.0
    %614 = vadd.xlane.f32.xlu0 %v613
    %v615 = vpop.xlane.xlu0 %614
    %v616 = vsel %vm41, %v610, 0.0
    %617 = vadd.xlane.f32.xlu0 %v616
    %v618 = vpop.xlane.xlu0 %617
    %v619 = vmul.f32 %v615, %v48
    %v620 = vmul.f32 %v618, %v48
    %v621 = vsub.f32 %v609, %v619
    %v622 = vsub.f32 %v610, %v620
    %v623 = vmul.f32 %v621, %v621
    %v624 = vmul.f32 %v622, %v622
    %v625 = vsel %vm41, %v623, 0.0
    %626 = vadd.xlane.f32.xlu0 %v625
    %v627 = vpop.xlane.xlu0 %626
    %v628 = vsel %vm41, %v624, 0.0
    %629 = vadd.xlane.f32.xlu0 %v628
    %v630 = vpop.xlane.xlu0 %629
    %v631 = vmul.f32 %v627, %v48
    %v632 = vmul.f32 %v630, %v48
    %v633 = vadd.f32 %v631, 1e-05
    %v634 = vadd.f32 %v632, 1e-05
    %v635 = vrsqrt.pop %v633
    %v636 = vrsqrt.pop %v634
    %v637 = vmul.f32 %v621, %v635
    %v638 = vmul.f32 %v622, %v636
    %v640 = vlaneseq
    %v641 = vshrl.u32 %v640, 7
    %v642 = vsub.s32 0, %v641
    %v643 = vrot.slane %v611, %v642
    %v645 = vmul.f32 %v637, %v643
    %v646 = vmul.f32 %v638, %v643
    %v648 = vlaneseq
    %v649 = vshrl.u32 %v648, 7
    %v650 = vsub.s32 0, %v649
    %v651 = vrot.slane %v612, %v650
    %v653 = vadd.f32 %v645, %v651
    %v654 = vadd.f32 %v646, %v651
    %v655 = vpack.c.bf16 %v654, %v653
    %v656 = vld [vmem:[%s6] sm:$0xf]
    %v657 = vld [vmem:[%s6 + $0x4] sm:$0xf]
    %v658 = vld [vmem:[%s6 + $0x8] sm:$0xf]
    %v659 = vld [vmem:[%s6 + $0xc] sm:$0xf]
    %v660 = vld [vmem:[%s7] sm:$0x1]
    %v662 = vlaneseq
    %v663 = vshrl.u32 %v662, 7
    %v664 = vsub.s32 0, %v663
    %v665 = vrot.slane %v660, %v664
    %v671 = vunpack.c.l.b16 %v656
    %v672 = vunpack.c.l.b16 %v657
    %v673 = vunpack.c.l.b16 %v658
    %v674 = vunpack.c.l.b16 %v659
    %v675 = vpack.c.b16 %v672, %v671
    %v676 = vpack.c.b16 %v674, %v673
    %v680 = vsel %vm41, %v655, 0
    %682 = vmatprep.subr.bf16.mxu0 0
    %683 = vmatpush1.bf16.msra.mxu0 %v675
    %684 = vmatprep.subr.bf16.mxu0 0
    %685 = vmatpush1.bf16.msra.mxu0 %v676
    %686 = vmatprep.subr.bf16.mxu0 0
    %687 = vmatpush1.bf16.msra.mxu0 0
    %688 = vmatprep.subr.bf16.mxu0 0
    %689 = vmatpush1.bf16.msra.mxu0 0
    %690 = vmatprep.subr.bf16.mxu0 0
    %691 = vmatpush1.bf16.msra.mxu0 0
    %692 = vmatprep.subr.bf16.mxu0 0
    %693 = vmatpush1.bf16.msra.mxu0 0
    %694 = vmatprep.subr.bf16.mxu0 0
    %695 = vmatpush1.bf16.msra.mxu0 0
    %696 = vmatprep.subr.bf16.mxu0 0
    %697 = vmatpush1.bf16.msra.mxu0 0
    %698 = vmatprep.subr.bf16.mxu0 0
    %699 = vmatpush1.bf16.msra.mxu0 0
    %700 = vmatprep.subr.bf16.mxu0 0
    %701 = vmatpush1.bf16.msra.mxu0 0
    %702 = vmatprep.subr.bf16.mxu0 0
    %703 = vmatpush1.bf16.msra.mxu0 0
    %704 = vmatprep.subr.bf16.mxu0 0
    %705 = vmatpush1.bf16.msra.mxu0 0
    %706 = vmatprep.subr.bf16.mxu0 0
    %707 = vmatpush1.bf16.msra.mxu0 0
    %708 = vmatprep.subr.bf16.mxu0 0
    %709 = vmatpush1.bf16.msra.mxu0 0
    %710 = vmatprep.subr.bf16.mxu0 0
    %711 = vmatpush1.bf16.msra.mxu0 0
    %712 = vmatprep.subr.bf16.mxu0 0
    %713 = vmatpush1.bf16.msra.mxu0 0
    %714 = vmatprep.mubr.bf16.mxu0 0
    %715 = vmatmul.mubr.bf16.gmra.mrb[0].mxu0 %v680
    %v716 = vpop.f32.mrb[0].mxu0
    %v717 = vadd.f32 %v665, %v716
    %v718 = vpop.f32.mrb[0].mxu0
    %v719 = vpop.f32.mrb[0].mxu0
    %v720 = vadd.f32 %v665, %v719
    %v721 = vpop.f32.mrb[0].mxu0
    %722 = vdwg.mxu0
    %v723 = vmax.f32 %v717, 0.0
    %v724 = vmax.f32 %v720, 0.0
    %v725 = vpack.c.bf16 %v724, %v723
    %v726 = vld [vmem:[%s8] sm:$0xf]
    %v727 = vld [vmem:[%s8 + $0x4] sm:$0xf]
    %v728 = vld [vmem:[%s8 + $0x8] sm:$0xf]
    %v729 = vld [vmem:[%s8 + $0xc] sm:$0xf]
    %v730 = vld [vmem:[%s8 + $0x10] sm:$0xf]
    %v731 = vld [vmem:[%s8 + $0x14] sm:$0xf]
    %v732 = vld [vmem:[%s8 + $0x18] sm:$0xf]
    %v733 = vld [vmem:[%s8 + $0x1c] sm:$0xf]
    %v734 = vld [vmem:[%s8 + $0x20] sm:$0xf]
    %v735 = vld [vmem:[%s8 + $0x24] sm:$0xf]
    %v736 = vld [vmem:[%s8 + $0x28] sm:$0xf]
    %v737 = vld [vmem:[%s8 + $0x2c] sm:$0xf]
    %v738 = vld [vmem:[%s8 + $0x30] sm:$0xf]
    %v739 = vld [vmem:[%s8 + $0x34] sm:$0xf]
    %v740 = vld [vmem:[%s8 + $0x38] sm:$0xf]
    %v741 = vld [vmem:[%s8 + $0x3c] sm:$0xf]
    %v742 = vld [vmem:[%s9] sm:$0x1]
    %v744 = vlaneseq
    %v745 = vshrl.u32 %v744, 7
    %v746 = vsub.s32 0, %v745
    %v747 = vrot.slane %v742, %v746
    %v765 = vunpack.c.l.b16 %v726
    %v766 = vunpack.c.l.b16 %v727
    %v767 = vunpack.c.l.b16 %v728
    %v768 = vunpack.c.l.b16 %v729
    %v769 = vunpack.c.l.b16 %v730
    %v770 = vunpack.c.l.b16 %v731
    %v771 = vunpack.c.l.b16 %v732
    %v772 = vunpack.c.l.b16 %v733
    %v773 = vunpack.c.l.b16 %v734
    %v774 = vunpack.c.l.b16 %v735
    %v775 = vunpack.c.l.b16 %v736
    %v776 = vunpack.c.l.b16 %v737
    %v777 = vunpack.c.l.b16 %v738
    %v778 = vunpack.c.l.b16 %v739
    %v779 = vunpack.c.l.b16 %v740
    %v780 = vunpack.c.l.b16 %v741
    %v781 = vpack.c.b16 %v766, %v765
    %v782 = vpack.c.b16 %v768, %v767
    %v783 = vpack.c.b16 %v770, %v769
    %v784 = vpack.c.b16 %v772, %v771
    %v785 = vpack.c.b16 %v774, %v773
    %v786 = vpack.c.b16 %v776, %v775
    %v787 = vpack.c.b16 %v778, %v777
    %v788 = vpack.c.b16 %v780, %v779
    %797 = vmatprep.subr.bf16.mxu0 0
    %798 = vmatpush1.bf16.msra.mxu0 %v781
    %799 = vmatprep.subr.bf16.mxu0 0
    %800 = vmatpush1.bf16.msra.mxu0 %v782
    %801 = vmatprep.subr.bf16.mxu0 0
    %802 = vmatpush1.bf16.msra.mxu0 %v783
    %803 = vmatprep.subr.bf16.mxu0 0
    %804 = vmatpush1.bf16.msra.mxu0 %v784
    %805 = vmatprep.subr.bf16.mxu0 0
    %806 = vmatpush1.bf16.msra.mxu0 %v785
    %807 = vmatprep.subr.bf16.mxu0 0
    %808 = vmatpush1.bf16.msra.mxu0 %v786
    %809 = vmatprep.subr.bf16.mxu0 0
    %810 = vmatpush1.bf16.msra.mxu0 %v787
    %811 = vmatprep.subr.bf16.mxu0 0
    %812 = vmatpush1.bf16.msra.mxu0 %v788
    %813 = vmatprep.subr.bf16.mxu0 0
    %814 = vmatpush1.bf16.msra.mxu0 0
    %815 = vmatprep.subr.bf16.mxu0 0
    %816 = vmatpush1.bf16.msra.mxu0 0
    %817 = vmatprep.subr.bf16.mxu0 0
    %818 = vmatpush1.bf16.msra.mxu0 0
    %819 = vmatprep.subr.bf16.mxu0 0
    %820 = vmatpush1.bf16.msra.mxu0 0
    %821 = vmatprep.subr.bf16.mxu0 0
    %822 = vmatpush1.bf16.msra.mxu0 0
    %823 = vmatprep.subr.bf16.mxu0 0
    %824 = vmatpush1.bf16.msra.mxu0 0
    %825 = vmatprep.subr.bf16.mxu0 0
    %826 = vmatpush1.bf16.msra.mxu0 0
    %827 = vmatprep.subr.bf16.mxu0 0
    %828 = vmatpush1.bf16.msra.mxu0 0
    %829 = vmatprep.mubr.bf16.mxu0 0
    %830 = vmatmul.mubr.bf16.gmra.mrb[0].mxu0 %v725
    %v831 = vpop.f32.mrb[0].mxu0
    %v832 = vadd.f32 %v747, %v831
    %v833 = vpop.f32.mrb[0].mxu0
    %v834 = vpop.f32.mrb[0].mxu0
    %v835 = vadd.f32 %v747, %v834
    %v836 = vpop.f32.mrb[0].mxu0
    %837 = vdwg.mxu0
    %v838 = vadd.f32 %v832, %v653
    %v839 = vadd.f32 %v835, %v654
    %840 = vst.msk [vmem:[#allocation2] sm:$0xff] %vm41, %v838
    %841 = vst.msk [vmem:[#allocation2 + $0x8] sm:$0xff] %vm41, %v839
    // Predicated region
    $region42: #{tpu_custom_call.1} parent=1 // pred_check
      _
    $region43: #{tpu_custom_call.1} parent=1 // pred_check_branch
      %843 = sbr.rel (0) target = $region45
    $region44: #{tpu_custom_call.1} parent=1 // pred_region
      %s845 = ssub.s32 256, 256
      %846 = vsyncadd [#allocation3], %s845
      %s847 = sshll.u32 [#allocation2], 4
      %s848 = int_to_ptr.vmem [resolvable:$true] %s847
      %853 = dma.vmem_to_hbm [thread:$0]  %s848, 256, %s10, [#allocation3], 128, 128, 8
    $region45: #{tpu_custom_call.1} parent=1 // pred_fallthru
      _
    // Predicated region
    $region46: #{tpu_custom_call.1} parent=1 // pred_check
      _
    $region47: #{tpu_custom_call.1} parent=1 // pred_check_branch
      %855 = sbr.rel (0) target = $region49
    $region48: #{tpu_custom_call.1} parent=1 // pred_region
      %856 = dma.done [#allocation3], 256
    $region49: #{tpu_custom_call.1} parent=1 // pred_fallthru
      _
    %857 = vsyncpa [#allocation3], 1

</llo_original>
